<compile_context>
chip_gen: v6e
topology: v6e:2x2x1
jax: 0.10.0
libtpu: 0.0.40
codegen_flags: <defaults>
</compile_context>

<pallas_src>
import jax
import jax.numpy as jnp
from jax import lax
from jax.experimental import pallas as pl
from jax.experimental.pallas import tpu as pltpu


def _pick_tile_h(h_out, w_out, target_rows=1024):
    """tile_h with tile_h*w_out ~= target_rows and (tile_h*w_out) % 8 == 0."""
    th = max(1, min(h_out, max(1, target_rows // max(w_out, 1))))
    for cand in range(th, 0, -1):                 # largest tile <= target, 8-row aligned
        if (cand * w_out) % 8 == 0:
            return cand
    for cand in range(th + 1, h_out + 1):         # grow if w_out is odd and th is small
        if (cand * w_out) % 8 == 0:
            return cand
    return h_out                                  # single tile: block equals full extent


def _make_conv_bn_relu_kernel(kh, kw_c, tile_h, w_out):
    """Fused conv (kh accumulated long-K dots) + BN shift + ReLU, bf16 out."""

    def kernel(xk_ref, w_ref, shift_ref, o_ref):
        # xk_ref:    (1, rows_in, w_out, kw*C)  bf16  kw-folded padded image (one batch elem)
        # w_ref:     (kh, kw*C, O_pad)          bf16  BN scale already folded in
        # shift_ref: (1, O_pad)                 f32   beta - mean*scale
        # o_ref:     (1, tile_h*w_out, O_pad)   bf16
        o_pad = o_ref.shape[-1]
        row0 = pl.program_id(1) * tile_h
        if tile_h % 8 == 0:
            row0 = pl.multiple_of(row0, 8)

        acc = jnp.zeros((tile_h * w_out, o_pad), jnp.float32)
        for i in range(kh):                       # kh dots, K = kw*C (MXU-friendly)
            lhs = xk_ref[0, pl.ds(row0 + i, tile_h), :, :]   # contiguous row band
            lhs = lhs.reshape(tile_h * w_out, kw_c)          # free leading-dim merge
            acc = acc + jnp.dot(lhs, w_ref[i],
                                preferred_element_type=jnp.float32)
        y = acc + shift_ref[...]                              # f32 epilogue: BN shift
        o_ref[0, :, :] = jnp.maximum(y, 0.0).astype(o_ref.dtype)   # ReLU + bf16 store

    return kernel


def basic_conv2d(x_nchw, weight, gamma, beta, running_mean, running_var,
                 *, padding=1, eps=1e-3, target_rows=1024):
    """Forward of BasicConv2d. x_nchw: (N, C, H, W); weight: (O, C, KH, KW)."""
    n, c, h, w = x_nchw.shape
    o, c_w, kh, kw = weight.shape
    assert c_w == c
    h_out = h + 2 * padding - kh + 1
    w_out = w + 2 * padding - kw + 1
    o_pad = ((o + 127) // 128) * 128              # lane-dense output channels
    kw_c = kw * c                                 # folded contraction dim

    tile_h = _pick_tile_h(h_out, w_out, target_rows)
    n_h_tiles = pl.cdiv(h_out, tile_h)
    h_rows_pad = n_h_tiles * tile_h               # output rows incl. ragged-tile pad
    rows_in = h_rows_pad + kh - 1                 # input rows the kernel may read
    tile_rows = tile_h * w_out

    # ---- glue (plain JAX): layout, zero-pad halo, kw-fold, BN fold, bf16 ----
    x_nhwc = jnp.transpose(x_nchw, (0, 2, 3, 1))  # NCHW -> NHWC
    x_pad = jnp.pad(x_nhwc, ((0, 0), (padding, rows_in - h - padding),
                             (padding, padding), (0, 0))).astype(jnp.bfloat16)
    # kw-fold: x_kw[n, r, col, j*C + c] = x_pad[n, r, col + j, c].  After this,
    # the kh tap shift is a pure row shift, so all in-kernel loads are contiguous.
    x_kw = jnp.concatenate([x_pad[:, :, j:j + w_out, :] for j in range(kw)],
                           axis=-1)               # (n, rows_in, w_out, kw*C)

    scale = (gamma / jnp.sqrt(running_var + eps)).astype(jnp.float32)   # (O,)
    shift = (beta - running_mean * scale).astype(jnp.float32)           # (O,)

    # weight (O,C,KH,KW) -> (KH, KW*C, O_pad); fold BN scale in f32; cast bf16.
    w_fold = jnp.transpose(weight, (2, 3, 1, 0)).astype(jnp.float32) * scale
    w_fold = jnp.pad(w_fold, ((0, 0), (0, 0), (0, 0), (0, o_pad - o)))
    w_fold = w_fold.reshape(kh, kw_c, o_pad).astype(jnp.bfloat16)
    shift_pad = jnp.pad(shift, (0, o_pad - o)).reshape(1, o_pad)

    kernel = _make_conv_bn_relu_kernel(kh, kw_c, tile_h, w_out)

    # ---- VMEM accounting (double-buffered blocks) & advisory cost ----
    xk_block = rows_in * w_out * kw_c * 2
    w_bytes = kh * kw_c * o_pad * 2
    out_block = tile_rows * o_pad * 2
    acc_bytes = tile_rows * o_pad * 4
    vmem_needed = 2 * (xk_block + w_bytes + o_pad * 4) + 2 * out_block + acc_bytes
    vmem_limit = int(min(max(32 << 20, 2 * vmem_needed), 44 << 20))

    cost = pl.CostEstimate(
        flops=2 * n * h_out * w_out * kh * kw * c * o_pad,
        transcendentals=0,
        bytes_accessed=(x_kw.size * 2 + w_fold.size * 2 + shift_pad.size * 4
                        + n * h_rows_pad * w_out * o_pad * 2))

    # ---- hot path: fused long-K conv dots + BN shift + ReLU, bf16 out ----
    out_flat = pl.pallas_call(
        kernel,
        out_shape=jax.ShapeDtypeStruct((n, h_rows_pad * w_out, o_pad), jnp.bfloat16),
        grid=(n, n_h_tiles),
        in_specs=[
            # kw-folded padded image of one batch element; block index constant
            # across the (sequential) h-tile axis => DMA'd from HBM once per n.
            pl.BlockSpec((1, rows_in, w_out, kw_c), lambda bi, hi: (bi, 0, 0, 0)),
            pl.BlockSpec((kh, kw_c, o_pad), lambda bi, hi: (0, 0, 0)),
            pl.BlockSpec((1, o_pad), lambda bi, hi: (0, 0)),
        ],
        out_specs=pl.BlockSpec((1, tile_rows, o_pad), lambda bi, hi: (bi, hi, 0)),
        compiler_params=pltpu.CompilerParams(
            dimension_semantics=("parallel", "arbitrary"),
            vmem_limit_bytes=vmem_limit),
        cost_estimate=cost,
    )(x_kw, w_fold, shift_pad)

    # Single fused pass: drop O/row padding, NHWC -> NCHW, back to input dtype.
    out = out_flat.reshape(n, h_rows_pad, w_out, o_pad)[:, :h_out, :, :o]
    return jnp.transpose(out, (0, 3, 1, 2)).astype(x_nchw.dtype)


def _reference(x_nchw, weight, gamma, beta, running_mean, running_var,
               *, padding=1, eps=1e-3):
    # bf16-consistent reference (same input/weight/output quantization as the
    # kernel, f32 accumulation) so tolerances stay tight.
    scale = gamma / jnp.sqrt(running_var + eps)
    shift = beta - running_mean * scale
    xq = x_nchw.astype(jnp.bfloat16).astype(jnp.float32)
    wq = (weight.astype(jnp.float32) * scale[:, None, None, None])
    wq = wq.astype(jnp.bfloat16).astype(jnp.float32)
    y = lax.conv_general_dilated(
        xq, wq, window_strides=(1, 1),
        padding=[(padding, padding), (padding, padding)],
        dimension_numbers=("NCHW", "OIHW", "NCHW"),
        precision=lax.Precision.HIGHEST)
    y = jnp.maximum(y + shift[None, :, None, None], 0.0)
    return y.astype(jnp.bfloat16).astype(jnp.float32)      # kernel writes bf16 output


if __name__ == "__main__":
    key = jax.random.PRNGKey(0)
    k_x, k_w, k_g, k_b, k_m, k_v = jax.random.split(key, 6)

    N, C, H, W = 2, 4, 16, 16
    O, KH, KW = 8, 3, 3

    x = jax.random.normal(k_x, (N, C, H, W), dtype=jnp.float32)
    weight = jax.random.normal(k_w, (O, C, KH, KW), dtype=jnp.float32) * 0.1
    gamma = jax.random.normal(k_g, (O,), dtype=jnp.float32) * 0.1 + 1.0
    beta = jax.random.normal(k_b, (O,), dtype=jnp.float32) * 0.1
    running_mean = jax.random.normal(k_m, (O,), dtype=jnp.float32) * 0.1
    running_var = jax.random.uniform(k_v, (O,), dtype=jnp.float32,
                                     minval=0.5, maxval=1.5)

    out = basic_conv2d(x, weight, gamma, beta, running_mean, running_var)
    out = jax.block_until_ready(out)

    ref = _reference(x, weight, gamma, beta, running_mean, running_var)
    assert out.shape == (N, O, H, W)
    assert jnp.allclose(out, ref, atol=2e-2, rtol=2e-2), "mismatch vs reference"

    print("KERNEL_OK")
</pallas_src>

<mosaic_0001>
module attributes {stable_mosaic.version = 11 : i64} {
  func.func @kernel(%arg0: i32, %arg1: i32, %arg2: memref<1x18x16x12xbf16, #tpu.memory_space<vmem>>, %arg3: memref<3x12x128xbf16, #tpu.memory_space<vmem>>, %arg4: memref<1x128xf32, #tpu.memory_space<vmem>>, %arg5: memref<1x256x128xbf16, #tpu.memory_space<vmem>>) attributes {dimension_semantics = [#tpu.dimension_semantics<parallel>, #tpu.dimension_semantics<arbitrary>], iteration_bounds = array<i64: 2, 1>, scalar_prefetch = 0 : i64, scratch_operands = 0 : i64, tpu.core_type = #tpu.core_type<tc>, window_params = [{transform_indices = @transform_0, window_bounds = array<i64: 1, 18, 16, 12>}, {pipeline_mode = #tpu.pipeline_mode<synchronous>, transform_indices = @transform_1, window_bounds = array<i64: 3, 12, 128>}, {pipeline_mode = #tpu.pipeline_mode<synchronous>, transform_indices = @transform_2, window_bounds = array<i64: 1, 128>}, {transform_indices = @transform_3, window_bounds = array<i64: 1, 256, 128>}]} {
    %c16_i32 = arith.constant 16 : i32
    %0 = arith.muli %arg1, %c16_i32 : i32
    %1 = tpu.assume_multiple %0, 8 : i32
    %cst = arith.constant 0.000000e+00 : f32
    %2 = vector.broadcast %cst : f32 to vector<256x128xf32>
    %c0_i32 = arith.constant 0 : i32
    %3 = arith.addi %1, %c0_i32 : i32
    %c0 = arith.constant 0 : index
    %4 = arith.index_cast %3 : i32 to index
    %c0_0 = arith.constant 0 : index
    %c0_1 = arith.constant 0 : index
    %5 = vector.load %arg2[%c0, %4, %c0_0, %c0_1] : memref<1x18x16x12xbf16, #tpu.memory_space<vmem>>, vector<1x16x16x12xbf16>
    %6 = vector.shape_cast %5 : vector<1x16x16x12xbf16> to vector<16x16x12xbf16>
    %7 = vector.shape_cast %6 : vector<16x16x12xbf16> to vector<256x12xbf16>
    %c0_2 = arith.constant 0 : index
    %c0_3 = arith.constant 0 : index
    %c0_4 = arith.constant 0 : index
    %8 = vector.load %arg3[%c0_2, %c0_3, %c0_4] : memref<3x12x128xbf16, #tpu.memory_space<vmem>>, vector<1x12x128xbf16>
    %9 = vector.shape_cast %8 : vector<1x12x128xbf16> to vector<12x128xbf16>
    %cst_5 = arith.constant dense<0.000000e+00> : vector<256x128xf32>
    %10 = tpu.matmul %7, %9, %cst_5 {dimension_numbers = #tpu.dot_dimension_numbers<[1], [0], [0], [1], [0, 0, 1, 1], [], []>} : vector<256x12xbf16>, vector<12x128xbf16>, vector<256x128xf32> -> vector<256x128xf32>
    %11 = arith.addf %2, %10 : vector<256x128xf32>
    %c1_i32 = arith.constant 1 : i32
    %12 = arith.addi %1, %c1_i32 : i32
    %c0_6 = arith.constant 0 : index
    %13 = arith.index_cast %12 : i32 to index
    %c0_7 = arith.constant 0 : index
    %c0_8 = arith.constant 0 : index
    %14 = vector.load %arg2[%c0_6, %13, %c0_7, %c0_8] : memref<1x18x16x12xbf16, #tpu.memory_space<vmem>>, vector<1x16x16x12xbf16>
    %15 = vector.shape_cast %14 : vector<1x16x16x12xbf16> to vector<16x16x12xbf16>
    %16 = vector.shape_cast %15 : vector<16x16x12xbf16> to vector<256x12xbf16>
    %c1 = arith.constant 1 : index
    %c0_9 = arith.constant 0 : index
    %c0_10 = arith.constant 0 : index
    %17 = vector.load %arg3[%c1, %c0_9, %c0_10] : memref<3x12x128xbf16, #tpu.memory_space<vmem>>, vector<1x12x128xbf16>
    %18 = vector.shape_cast %17 : vector<1x12x128xbf16> to vector<12x128xbf16>
    %cst_11 = arith.constant dense<0.000000e+00> : vector<256x128xf32>
    %19 = tpu.matmul %16, %18, %cst_11 {dimension_numbers = #tpu.dot_dimension_numbers<[1], [0], [0], [1], [0, 0, 1, 1], [], []>} : vector<256x12xbf16>, vector<12x128xbf16>, vector<256x128xf32> -> vector<256x128xf32>
    %20 = arith.addf %11, %19 : vector<256x128xf32>
    %c2_i32 = arith.constant 2 : i32
    %21 = arith.addi %1, %c2_i32 : i32
    %c0_12 = arith.constant 0 : index
    %22 = arith.index_cast %21 : i32 to index
    %c0_13 = arith.constant 0 : index
    %c0_14 = arith.constant 0 : index
    %23 = vector.load %arg2[%c0_12, %22, %c0_13, %c0_14] : memref<1x18x16x12xbf16, #tpu.memory_space<vmem>>, vector<1x16x16x12xbf16>
    %24 = vector.shape_cast %23 : vector<1x16x16x12xbf16> to vector<16x16x12xbf16>
    %25 = vector.shape_cast %24 : vector<16x16x12xbf16> to vector<256x12xbf16>
    %c2 = arith.constant 2 : index
    %c0_15 = arith.constant 0 : index
    %c0_16 = arith.constant 0 : index
    %26 = vector.load %arg3[%c2, %c0_15, %c0_16] : memref<3x12x128xbf16, #tpu.memory_space<vmem>>, vector<1x12x128xbf16>
    %27 = vector.shape_cast %26 : vector<1x12x128xbf16> to vector<12x128xbf16>
    %cst_17 = arith.constant dense<0.000000e+00> : vector<256x128xf32>
    %28 = tpu.matmul %25, %27, %cst_17 {dimension_numbers = #tpu.dot_dimension_numbers<[1], [0], [0], [1], [0, 0, 1, 1], [], []>} : vector<256x12xbf16>, vector<12x128xbf16>, vector<256x128xf32> -> vector<256x128xf32>
    %29 = arith.addf %20, %28 : vector<256x128xf32>
    %c0_18 = arith.constant 0 : index
    %c0_19 = arith.constant 0 : index
    %30 = vector.load %arg4[%c0_18, %c0_19] : memref<1x128xf32, #tpu.memory_space<vmem>>, vector<1x128xf32>
    %31 = vector.broadcast %30 : vector<1x128xf32> to vector<256x128xf32>
    %32 = arith.addf %29, %31 : vector<256x128xf32>
    %cst_20 = arith.constant 0.000000e+00 : f32
    %33 = vector.broadcast %cst_20 : f32 to vector<256x128xf32>
    %34 = arith.maximumf %32, %33 : vector<256x128xf32>
    %35 = arith.truncf %34 : vector<256x128xf32> to vector<256x128xbf16>
    %c0_21 = arith.constant 0 : index
    %c0_22 = arith.constant 0 : index
    %c0_23 = arith.constant 0 : index
    %36 = vector.load %arg5[%c0_21, %c0_22, %c0_23] : memref<1x256x128xbf16, #tpu.memory_space<vmem>>, vector<1x256x128xbf16>
    %37 = vector.shape_cast %36 : vector<1x256x128xbf16> to vector<256x128xbf16>
    %38 = vector.shape_cast %35 : vector<256x128xbf16> to vector<1x256x128xbf16>
    tpu.vector_store %arg5[%c0_21, %c0_22, %c0_23], %38 {strides = array<i32>} : memref<1x256x128xbf16, #tpu.memory_space<vmem>>, vector<1x256x128xbf16>,
    return
  }
  func.func @transform_0(%arg0: i32, %arg1: i32) -> (i32, i32, i32, i32) {
    %c0_i32 = arith.constant 0 : i32
    %c0_i32_0 = arith.constant 0 : i32
    %c0_i32_1 = arith.constant 0 : i32
    %c0_i32_2 = arith.constant 0 : i32
    return %arg0, %c0_i32, %c0_i32_0, %c0_i32_1 : i32, i32, i32, i32
  }
  func.func @transform_1(%arg0: i32, %arg1: i32) -> (i32, i32, i32) {
    %c0_i32 = arith.constant 0 : i32
    %c0_i32_0 = arith.constant 0 : i32
    %c0_i32_1 = arith.constant 0 : i32
    %c0_i32_2 = arith.constant 0 : i32
    return %c0_i32, %c0_i32_0, %c0_i32_1 : i32, i32, i32
  }
  func.func @transform_2(%arg0: i32, %arg1: i32) -> (i32, i32) {
    %c0_i32 = arith.constant 0 : i32
    %c0_i32_0 = arith.constant 0 : i32
    %c0_i32_1 = arith.constant 0 : i32
    return %c0_i32, %c0_i32_0 : i32, i32
  }
  func.func @transform_3(%arg0: i32, %arg1: i32) -> (i32, i32, i32) {
    %c0_i32 = arith.constant 0 : i32
    %c0_i32_0 = arith.constant 0 : i32
    return %arg0, %arg1, %c0_i32 : i32, i32, i32
  }
}

</mosaic_0001>

<llo_original>
// kernel: tpu_custom_call.1
$region0: #{tpu_custom_call.1}
  #allocation0 [shape = 'u32[]', space=smem, size = 0x4, offset = 0x4, fixed_abs, tag = 'smem constant byte address 0x4 - core index']
  #allocation1 [shape = 'u32[144,128]{1,0:T(1,128)}', space=vmem, size = 0x12000, scoped, tag = 'internal scratch']
  %s0 = inlined_call_operand.vmem [shape: bf16[2,18,16,12], index: 0, kind: input, shape index: {}]
  %s1 = inlined_call_operand.vmem [shape: bf16[3,12,128], index: 1, kind: input, shape index: {}]
  %s2 = inlined_call_operand.vmem [shape: f32[1,128], index: 2, kind: input, shape index: {}]
  %s3 = inlined_call_operand.hbm [shape: bf16[2,256,128], index: 3, kind: output, shape index: {}]
  %s4 = sld [smem:[#allocation0]]
  $region45: #{tpu_custom_call.1} parent=0
    _
  %s6 = ssub.s32 1, %s4
  %s7 = scalar_select 0, %s6, %s4
  $region1: #{tpu_custom_call.1} parent=0
    #allocation2 [shape = 'u8[131072]{0}', space=vmem, size = 0x20000, scoped, tag = 'output window, operand 0']
    #allocation3 [shape = 's32[2]{0}', space=sflag, size = 0x8, scoped, tag = 'scoped memory for tpu_custom_call.1']
    %8 = vsyncpa [#allocation3], 0
    %s9 = scalar_lea.sflag [#allocation3], 1
    %10 = vsyncpa %s9, 0
    loop: start=0, step=1, limit=4
    $region2: #{tpu_custom_call.1} parent=1 // loop_pre_header
      _
    $region3: #{tpu_custom_call.1} parent=1 // loop_header
      %s12 = sphi 0, %s16
      %p13 = scmp.ge.s32.totalorder %s12, 4
      %s19 = sphi 0, %s31
      %s20 = sphi 0, %s27
      %s21 = sphi 0, %s19
      %s22 = sphi 0, %s20
      %s23 = sphi 0, %s21
      %s24 = sphi 0, %s22
      %s34 = sphi 0, %s36
      %s37 = sphi 0, %s34
      %s38 = sphi 0, %s37
      %s54 = sphi 0, %s38
      %s58 = sphi 0, %s58
      %s60 = sphi 0, %s58
      %s61 = sphi 0, %s60
      %s75 = sphi 0, %s61
      %s79 = sphi 0, %s79
      %s81 = sphi 0, %s79
      %s82 = sphi 0, %s81
      %s96 = sphi 0, %s82
      %s104 = sphi 0, %s106
      %s107 = sphi 0, %s104
      %s108 = sphi 0, %s107
      %s124 = sphi 0, %s108
    $region4: #{tpu_custom_call.1} parent=1 // loop_header_branch
      %15 = sbr.rel (%p13) target = $region8
    $region5: #{tpu_custom_call.1} parent=1 // loop_body
      %s17 = ssub.s32 %s12, 1
      %s18 = ssub.s32 %s12, 2
      %s25 = sadd.s32 1, %s20
      %p26 = scmp.ge.s32.totalorder %s25, 1
      %s27 = scalar_select %p26, 0, %s25
      %s28 = sadd.s32 1, %s19
      %s29 = scalar_select %p26, %s28, %s19
      %p30 = scmp.ge.s32.totalorder %s29, 2
      %s31 = scalar_select %p30, 0, %s29
      %s32 = ssub.s32 %s19, %s31
      %p33 = scmp.eq.s32.totalorder %s32, 0
      %s35 = sadd.s32 %s34, 1
      %s36 = scalar_select %p33, %s34, %s35
      %p39 = pneg %p33
      %p40 = scmp.eq.s32.totalorder %s12, 1
      %p41 = por %p39, %p40
      %p42 = scmp.ne.s32.totalorder %s34, %s37
      %p43 = scmp.eq.s32.totalorder %s12, 0
      %p44 = por %p42, %p43
      %p45 = scmp.ne.s32.totalorder %s34, %s37
      %p46 = scmp.eq.s32.totalorder %s17, 1
      %p47 = por %p45, %p46
      %p48 = scmp.ne.s32.totalorder %s37, %s38
      %p49 = scmp.eq.s32.totalorder %s17, 0
      %p50 = por %p48, %p49
      %p51 = scmp.ne.s32.totalorder %s37, %s38
      %p52 = scmp.eq.s32.totalorder %s18, 1
      %p53 = por %p51, %p52
      %p55 = scmp.ne.s32.totalorder %s38, %s54
      %p56 = scmp.eq.s32.totalorder %s18, 0
      %p57 = por %p55, %p56
      %s59 = sadd.s32 %s58, 1
      %p62 = scmp.eq.s32.totalorder %s12, 1
      %p63 = scmp.ne.s32.totalorder %s58, %s60
      %p64 = scmp.eq.s32.totalorder %s12, 0
      %p65 = por %p63, %p64
      %p66 = scmp.ne.s32.totalorder %s58, %s60
      %p67 = scmp.eq.s32.totalorder %s17, 1
      %p68 = por %p66, %p67
      %p69 = scmp.ne.s32.totalorder %s60, %s61
      %p70 = scmp.eq.s32.totalorder %s17, 0
      %p71 = por %p69, %p70
      %p72 = scmp.ne.s32.totalorder %s60, %s61
      %p73 = scmp.eq.s32.totalorder %s18, 1
      %p74 = por %p72, %p73
      %p76 = scmp.ne.s32.totalorder %s61, %s75
      %p77 = scmp.eq.s32.totalorder %s18, 0
      %p78 = por %p76, %p77
      %s80 = sadd.s32 %s79, 1
      %p83 = scmp.eq.s32.totalorder %s12, 1
      %p84 = scmp.ne.s32.totalorder %s79, %s81
      %p85 = scmp.eq.s32.totalorder %s12, 0
      %p86 = por %p84, %p85
      %p87 = scmp.ne.s32.totalorder %s79, %s81
      %p88 = scmp.eq.s32.totalorder %s17, 1
      %p89 = por %p87, %p88
      %p90 = scmp.ne.s32.totalorder %s81, %s82
      %p91 = scmp.eq.s32.totalorder %s17, 0
      %p92 = por %p90, %p91
      %p93 = scmp.ne.s32.totalorder %s81, %s82
      %p94 = scmp.eq.s32.totalorder %s18, 1
      %p95 = por %p93, %p94
      %p97 = scmp.ne.s32.totalorder %s82, %s96
      %p98 = scmp.eq.s32.totalorder %s18, 0
      %p99 = por %p97, %p98
      %s100 = ssub.s32 %s19, %s31
      %s101 = ssub.s32 %s20, %s27
      %s102 = sor.u32 %s100, %s101
      %p103 = scmp.eq.s32.totalorder %s102, 0
      %s105 = sadd.s32 %s104, 1
      %s106 = scalar_select %p103, %s104, %s105
      %p109 = pneg %p103
      %p110 = scmp.eq.s32.totalorder %s12, 1
      %p111 = por %p109, %p110
      %p112 = scmp.ne.s32.totalorder %s104, %s107
      %p113 = scmp.eq.s32.totalorder %s12, 0
      %p114 = por %p112, %p113
      %p115 = scmp.ne.s32.totalorder %s104, %s107
      %p116 = scmp.eq.s32.totalorder %s17, 1
      %p117 = por %p115, %p116
      %p118 = scmp.ne.s32.totalorder %s107, %s108
      %p119 = scmp.eq.s32.totalorder %s17, 0
      %p120 = por %p118, %p119
      %p121 = scmp.ne.s32.totalorder %s107, %s108
      %p122 = scmp.eq.s32.totalorder %s18, 1
      %p123 = por %p121, %p122
      %p125 = scmp.ne.s32.totalorder %s108, %s124
      %p126 = scmp.eq.s32.totalorder %s18, 0
      %p127 = por %p125, %p126
      %p128 = scmp.le.s32.totalorder 1, %s12
      %p129 = scmp.lt.s32.totalorder %s12, 3
      %p130 = pnand %p128, %p129
      %p131 = pneg %p130
      // Predicated region
      $region9: #{tpu_custom_call.1} parent=5 // pred_check
        _
      $region10: #{tpu_custom_call.1} parent=5 // pred_check_branch
        %133 = sbr.rel (%p130) target = $region12
      $region11: #{tpu_custom_call.1} parent=5 // pred_region
        %s134 = ssub.s32 %s12, 1
        // Predicated region
        $region13: #{tpu_custom_call.1} parent=11 // pred_check
          %p135 = pneg %p71
        $region14: #{tpu_custom_call.1} parent=11 // pred_check_branch
          %137 = sbr.rel (%p135) target = $region16
        $region15: #{tpu_custom_call.1} parent=11 // pred_region
          _
        $region16: #{tpu_custom_call.1} parent=11 // pred_fallthru
          _
        // Predicated region
        $region17: #{tpu_custom_call.1} parent=11 // pred_check
          %p138 = pneg %p92
        $region18: #{tpu_custom_call.1} parent=11 // pred_check_branch
          %140 = sbr.rel (%p138) target = $region20
        $region19: #{tpu_custom_call.1} parent=11 // pred_region
          _
        $region20: #{tpu_custom_call.1} parent=11 // pred_fallthru
          _
      $region12: #{tpu_custom_call.1} parent=5 // pred_fallthru
        _
      %p141 = scmp.lt.s32.totalorder %s12, 2
      // Predicated region
      $region21: #{tpu_custom_call.1} parent=5 // pred_check
        %p142 = pneg %p141
      $region22: #{tpu_custom_call.1} parent=5 // pred_check_branch
        %144 = sbr.rel (%p142) target = $region24
      $region23: #{tpu_custom_call.1} parent=5 // pred_region
        // Predicated region
        $region25: #{tpu_custom_call.1} parent=23 // pred_check
          %p145 = pneg %p44
        $region26: #{tpu_custom_call.1} parent=23 // pred_check_branch
          %147 = sbr.rel (%p145) target = $region28
        $region27: #{tpu_custom_call.1} parent=23 // pred_region
          %p148 = scmp.lt.s32.totalorder %s19, 1
          %s149 = scalar_select %p148, %s19, 1
          %s150 = smul.addr %s149, 36
          %s151 = smul.addr %s150, 4
          %s152 = scalar_lea.vmem %s0, %s151
        $region28: #{tpu_custom_call.1} parent=23 // pred_fallthru
          _
      $region24: #{tpu_custom_call.1} parent=5 // pred_fallthru
        _
      %p153 = scmp.le.s32.totalorder 1, %s12
      %p154 = scmp.lt.s32.totalorder %s12, 3
      %p155 = pnand %p153, %p154
      %p156 = pneg %p155
      // Predicated region
      $region29: #{tpu_custom_call.1} parent=5 // pred_check
        _
      $region30: #{tpu_custom_call.1} parent=5 // pred_check_branch
        %158 = sbr.rel (%p155) target = $region32
      $region31: #{tpu_custom_call.1} parent=5 // pred_region
        %s159 = ssub.s32 %s12, 1
        %p160 = scmp.lt.s32.totalorder %s21, 1
        %s161 = scalar_select %p160, %s21, 1
        %s162 = smul.addr %s161, 36
        %s163 = smul.addr %s162, 4
        %s164 = scalar_lea.vmem %s0, %s163
        %p165 = pneg %p50
        %p166 = pneg %p47
        %p167 = pneg %p71
        %p168 = pneg %p68
        %p169 = pneg %p92
        %p170 = pneg %p89
        %p171 = pneg %p120
        %p172 = pneg %p117
        %s173 = sand.u32 %s107, 1
        %s174 = scalar_lea.sflag [#allocation3], %s173
        %s175 = sand.u32 %s107, 1
        %s176 = smul.addr %s175, 128
        %s177 = scalar_lea.vmem [#allocation2], %s176
        %p178 = scmp.lt.s32.totalorder %s21, 1
        %s179 = scalar_select %p178, %s21, 1
        %s180 = smul.addr %s179, 36
        %s181 = smul.addr %s180, 4
        %s182 = scalar_lea.vmem %s0, %s181
        %s183 = smul.u32 32, %s22
        %s185 = smul.u32 %s22, 16
        %s186 = smul.u32 %s185, 2
        %s187 = smul.addr %s186, 4
        %s188 = scalar_lea.vmem %s182, %s187
        %v189 = vld [vmem:[%s188] sm:$0xf]
        %v190 = vld [vmem:[%s188 + $0x4] sm:$0xf]
        %v191 = vld [vmem:[%s188 + $0x8] sm:$0xf]
        %v192 = vld [vmem:[%s188 + $0xc] sm:$0xf]
        %v193 = vld [vmem:[%s188 + $0x10] sm:$0xf]
        %v194 = vld [vmem:[%s188 + $0x14] sm:$0xf]
        %v195 = vld [vmem:[%s188 + $0x18] sm:$0xf]
        %v196 = vld [vmem:[%s188 + $0x1c] sm:$0xf]
        %v197 = vld [vmem:[%s188 + $0x20] sm:$0xf]
        %v198 = vld [vmem:[%s188 + $0x24] sm:$0xf]
        %v199 = vld [vmem:[%s188 + $0x28] sm:$0xf]
        %v200 = vld [vmem:[%s188 + $0x2c] sm:$0xf]
        %v201 = vld [vmem:[%s188 + $0x30] sm:$0xf]
        %v202 = vld [vmem:[%s188 + $0x34] sm:$0xf]
        %v203 = vld [vmem:[%s188 + $0x38] sm:$0xf]
        %v204 = vld [vmem:[%s188 + $0x3c] sm:$0xf]
        %v205 = vld [vmem:[%s188 + $0x40] sm:$0xf]
        %v206 = vld [vmem:[%s188 + $0x44] sm:$0xf]
        %v207 = vld [vmem:[%s188 + $0x48] sm:$0xf]
        %v208 = vld [vmem:[%s188 + $0x4c] sm:$0xf]
        %v209 = vld [vmem:[%s188 + $0x50] sm:$0xf]
        %v210 = vld [vmem:[%s188 + $0x54] sm:$0xf]
        %v211 = vld [vmem:[%s188 + $0x58] sm:$0xf]
        %v212 = vld [vmem:[%s188 + $0x5c] sm:$0xf]
        %v213 = vld [vmem:[%s188 + $0x60] sm:$0xf]
        %v214 = vld [vmem:[%s188 + $0x64] sm:$0xf]
        %v215 = vld [vmem:[%s188 + $0x68] sm:$0xf]
        %v216 = vld [vmem:[%s188 + $0x6c] sm:$0xf]
        %v217 = vld [vmem:[%s188 + $0x70] sm:$0xf]
        %v218 = vld [vmem:[%s188 + $0x74] sm:$0xf]
        %v219 = vld [vmem:[%s188 + $0x78] sm:$0xf]
        %v220 = vld [vmem:[%s188 + $0x7c] sm:$0xf]
        %v221 = vld [vmem:[%s1] sm:$0xf]
        %v222 = vld [vmem:[%s1 + $0x4] sm:$0x3]
        %s223 = sadd.s32 %s185, 1
        %s224 = smul.u32 %s223, 2
        %s225 = smul.addr %s224, 4
        %s226 = scalar_lea.vmem %s182, %s225
        %v227 = vld [vmem:[%s226] sm:$0xf]
        %v228 = vld [vmem:[%s226 + $0x4] sm:$0xf]
        %v229 = vld [vmem:[%s226 + $0x8] sm:$0xf]
        %v230 = vld [vmem:[%s226 + $0xc] sm:$0xf]
        %v231 = vld [vmem:[%s226 + $0x10] sm:$0xf]
        %v232 = vld [vmem:[%s226 + $0x14] sm:$0xf]
        %v233 = vld [vmem:[%s226 + $0x18] sm:$0xf]
        %v234 = vld [vmem:[%s226 + $0x1c] sm:$0xf]
        %v235 = vld [vmem:[%s226 + $0x20] sm:$0xf]
        %v236 = vld [vmem:[%s226 + $0x24] sm:$0xf]
        %v237 = vld [vmem:[%s226 + $0x28] sm:$0xf]
        %v238 = vld [vmem:[%s226 + $0x2c] sm:$0xf]
        %v239 = vld [vmem:[%s226 + $0x30] sm:$0xf]
        %v240 = vld [vmem:[%s226 + $0x34] sm:$0xf]
        %v241 = vld [vmem:[%s226 + $0x38] sm:$0xf]
        %v242 = vld [vmem:[%s226 + $0x3c] sm:$0xf]
        %v243 = vld [vmem:[%s226 + $0x40] sm:$0xf]
        %v244 = vld [vmem:[%s226 + $0x44] sm:$0xf]
        %v245 = vld [vmem:[%s226 + $0x48] sm:$0xf]
        %v246 = vld [vmem:[%s226 + $0x4c] sm:$0xf]
        %v247 = vld [vmem:[%s226 + $0x50] sm:$0xf]
        %v248 = vld [vmem:[%s226 + $0x54] sm:$0xf]
        %v249 = vld [vmem:[%s226 + $0x58] sm:$0xf]
        %v250 = vld [vmem:[%s226 + $0x5c] sm:$0xf]
        %v251 = vld [vmem:[%s226 + $0x60] sm:$0xf]
        %v252 = vld [vmem:[%s226 + $0x64] sm:$0xf]
        %v253 = vld [vmem:[%s226 + $0x68] sm:$0xf]
        %v254 = vld [vmem:[%s226 + $0x6c] sm:$0xf]
        %v255 = vld [vmem:[%s226 + $0x70] sm:$0xf]
        %v256 = vld [vmem:[%s226 + $0x74] sm:$0xf]
        %v257 = vld [vmem:[%s226 + $0x78] sm:$0xf]
        %v258 = vld [vmem:[%s226 + $0x7c] sm:$0xf]
        %s259 = scalar_lea.vmem %s1, 8
        %v260 = vld [vmem:[%s259] sm:$0xf]
        %v261 = vld [vmem:[%s259 + $0x4] sm:$0x3]
        %v294 = vunpack.c.l.b16 %v227
        %v295 = vunpack.c.l.b16 %v228
        %v296 = vunpack.c.l.b16 %v229
        %v297 = vunpack.c.l.b16 %v230
        %v298 = vunpack.c.l.b16 %v231
        %v299 = vunpack.c.l.b16 %v232
        %v300 = vunpack.c.l.b16 %v233
        %v301 = vunpack.c.l.b16 %v234
        %v302 = vunpack.c.l.b16 %v235
        %v303 = vunpack.c.l.b16 %v236
        %v304 = vunpack.c.l.b16 %v237
        %v305 = vunpack.c.l.b16 %v238
        %v306 = vunpack.c.l.b16 %v239
        %v307 = vunpack.c.l.b16 %v240
        %v308 = vunpack.c.l.b16 %v241
        %v309 = vunpack.c.l.b16 %v242
        %v310 = vunpack.c.l.b16 %v243
        %v311 = vunpack.c.l.b16 %v244
        %v312 = vunpack.c.l.b16 %v245
        %v313 = vunpack.c.l.b16 %v246
        %v314 = vunpack.c.l.b16 %v247
        %v315 = vunpack.c.l.b16 %v248
        %v316 = vunpack.c.l.b16 %v249
        %v317 = vunpack.c.l.b16 %v250
        %v318 = vunpack.c.l.b16 %v251
        %v319 = vunpack.c.l.b16 %v252
        %v320 = vunpack.c.l.b16 %v253
        %v321 = vunpack.c.l.b16 %v254
        %v322 = vunpack.c.l.b16 %v255
        %v323 = vunpack.c.l.b16 %v256
        %v324 = vunpack.c.l.b16 %v257
        %v325 = vunpack.c.l.b16 %v258
        %v326 = vpack.c.b16 %v295, %v294
        %v327 = vpack.c.b16 %v297, %v296
        %v328 = vpack.c.b16 %v299, %v298
        %v329 = vpack.c.b16 %v301, %v300
        %v330 = vpack.c.b16 %v303, %v302
        %v331 = vpack.c.b16 %v305, %v304
        %v332 = vpack.c.b16 %v307, %v306
        %v333 = vpack.c.b16 %v309, %v308
        %v334 = vpack.c.b16 %v311, %v310
        %v335 = vpack.c.b16 %v313, %v312
        %v336 = vpack.c.b16 %v315, %v314
        %v337 = vpack.c.b16 %v317, %v316
        %v338 = vpack.c.b16 %v319, %v318
        %v339 = vpack.c.b16 %v321, %v320
        %v340 = vpack.c.b16 %v323, %v322
        %v341 = vpack.c.b16 %v325, %v324
        %v344 = vunpack.c.l.b16 %v260
        %v345 = vunpack.c.l.b16 %v261
        %v346 = vpack.c.b16 %v345, %v344
        %vm347 = vcmask 97280
        %v349 = vsel %vm347, %v326, 0
        %v352 = vsel %vm347, %v327, 0
        %v355 = vsel %vm347, %v328, 0
        %v358 = vsel %vm347, %v329, 0
        %v361 = vsel %vm347, %v330, 0
        %v364 = vsel %vm347, %v331, 0
        %v367 = vsel %vm347, %v332, 0
        %v370 = vsel %vm347, %v333, 0
        %v373 = vsel %vm347, %v334, 0
        %v376 = vsel %vm347, %v335, 0
        %v379 = vsel %vm347, %v336, 0
        %v382 = vsel %vm347, %v337, 0
        %v385 = vsel %vm347, %v338, 0
        %v388 = vsel %vm347, %v339, 0
        %v391 = vsel %vm347, %v340, 0
        %v394 = vsel %vm347, %v341, 0
        %vm396 = vcmask 1045504
        %v398 = vsel %vm396, %v346, 0
        %400 = vmatprep.subr.bf16.mxu0 0
        %401 = vmatpush1.bf16.msra.mxu0 0
        %402 = vmatprep.subr.bf16.mxu0 0
        %403 = vmatpush1.bf16.msra.mxu0 0
        %404 = vmatprep.subr.bf16.mxu0 0
        %405 = vmatpush1.bf16.msra.mxu0 0
        %406 = vmatprep.subr.bf16.mxu0 0
        %407 = vmatpush1.bf16.msra.mxu0 0
        %408 = vmatprep.subr.bf16.mxu0 0
        %409 = vmatpush1.bf16.msra.mxu0 0
        %410 = vmatprep.subr.bf16.mxu0 0
        %411 = vmatpush1.bf16.msra.mxu0 0
        %412 = vmatprep.subr.bf16.mxu0 0
        %413 = vmatpush1.bf16.msra.mxu0 0
        %414 = vmatprep.subr.bf16.mxu0 0
        %415 = vmatpush1.bf16.msra.mxu0 %v398
        %416 = vmatprep.subr.bf16.mxu0 0
        %417 = vmatpush2.bf16.msra.mxu0 0
        %418 = vmatprep.subr.bf16.mxu0 0
        %419 = vmatpush2.bf16.msra.mxu0 0
        %420 = vmatprep.subr.bf16.mxu0 0
        %421 = vmatpush2.bf16.msra.mxu0 0
        %422 = vmatprep.subr.bf16.mxu0 0
        %423 = vmatpush2.bf16.msra.mxu0 0
        %424 = vmatprep.subr.bf16.mxu0 0
        %425 = vmatpush2.bf16.msra.mxu0 0
        %426 = vmatprep.subr.bf16.mxu0 0
        %427 = vmatpush2.bf16.msra.mxu0 0
        %428 = vmatprep.subr.bf16.mxu0 0
        %429 = vmatpush2.bf16.msra.mxu0 0
        %430 = vmatprep.subr.bf16.mxu0 0
        %431 = vmatpush2.bf16.msra.mxu0 0
        %432 = vmatprep.mubr.bf16.mxu0 0
        %433 = vmatmul.mubr.bf16.gmra.mxu0 %v349
        %v434 = vpop.f32.mrf.mxu0
        %v435 = vadd.f32 0.0, %v434
        %v436 = vpop.f32.mrf.mxu0
        %v437 = vpop.f32.mrf.mxu0
        %v438 = vadd.f32 0.0, %v437
        %v439 = vpop.f32.mrf.mxu0
        %440 = vmatprep.mubr.bf16.mxu0 0
        %441 = vmatmul.mubr.bf16.gmra.mxu0 %v352
        %v442 = vpop.f32.mrf.mxu0
        %v443 = vadd.f32 0.0, %v442
        %v444 = vpop.f32.mrf.mxu0
        %v445 = vpop.f32.mrf.mxu0
        %v446 = vadd.f32 0.0, %v445
        %v447 = vpop.f32.mrf.mxu0
        %448 = vmatprep.mubr.bf16.mxu0 0
        %449 = vmatmul.mubr.bf16.gmra.mxu0 %v355
        %v450 = vpop.f32.mrf.mxu0
        %v451 = vadd.f32 0.0, %v450
        %v452 = vpop.f32.mrf.mxu0
        %v453 = vpop.f32.mrf.mxu0
        %v454 = vadd.f32 0.0, %v453
        %v455 = vpop.f32.mrf.mxu0
        %456 = vmatprep.mubr.bf16.mxu0 0
        %457 = vmatmul.mubr.bf16.gmra.mxu0 %v358
        %v458 = vpop.f32.mrf.mxu0
        %v459 = vadd.f32 0.0, %v458
        %v460 = vpop.f32.mrf.mxu0
        %v461 = vpop.f32.mrf.mxu0
        %v462 = vadd.f32 0.0, %v461
        %v463 = vpop.f32.mrf.mxu0
        %464 = vmatprep.mubr.bf16.mxu0 0
        %465 = vmatmul.mubr.bf16.gmra.mxu0 %v361
        %v466 = vpop.f32.mrf.mxu0
        %v467 = vadd.f32 0.0, %v466
        %v468 = vpop.f32.mrf.mxu0
        %v469 = vpop.f32.mrf.mxu0
        %v470 = vadd.f32 0.0, %v469
        %v471 = vpop.f32.mrf.mxu0
        %472 = vmatprep.mubr.bf16.mxu0 0
        %473 = vmatmul.mubr.bf16.gmra.mxu0 %v364
        %v474 = vpop.f32.mrf.mxu0
        %v475 = vadd.f32 0.0, %v474
        %v476 = vpop.f32.mrf.mxu0
        %v477 = vpop.f32.mrf.mxu0
        %v478 = vadd.f32 0.0, %v477
        %v479 = vpop.f32.mrf.mxu0
        %480 = vmatprep.mubr.bf16.mxu0 0
        %481 = vmatmul.mubr.bf16.gmra.mxu0 %v367
        %v482 = vpop.f32.mrf.mxu0
        %v483 = vadd.f32 0.0, %v482
        %v484 = vpop.f32.mrf.mxu0
        %v485 = vpop.f32.mrf.mxu0
        %v486 = vadd.f32 0.0, %v485
        %v487 = vpop.f32.mrf.mxu0
        %488 = vmatprep.mubr.bf16.mxu0 0
        %489 = vmatmul.mubr.bf16.gmra.mxu0 %v370
        %v490 = vpop.f32.mrf.mxu0
        %v491 = vadd.f32 0.0, %v490
        %v492 = vpop.f32.mrf.mxu0
        %v493 = vpop.f32.mrf.mxu0
        %v494 = vadd.f32 0.0, %v493
        %v495 = vpop.f32.mrf.mxu0
        %496 = vmatprep.mubr.bf16.mxu0 0
        %497 = vmatmul.mubr.bf16.gmra.mxu0 %v373
        %v498 = vpop.f32.mrf.mxu0
        %v499 = vadd.f32 0.0, %v498
        %v500 = vpop.f32.mrf.mxu0
        %v501 = vpop.f32.mrf.mxu0
        %v502 = vadd.f32 0.0, %v501
        %v503 = vpop.f32.mrf.mxu0
        %504 = vmatprep.mubr.bf16.mxu0 0
        %505 = vmatmul.mubr.bf16.gmra.mxu0 %v376
        %v506 = vpop.f32.mrf.mxu0
        %v507 = vadd.f32 0.0, %v506
        %v508 = vpop.f32.mrf.mxu0
        %v509 = vpop.f32.mrf.mxu0
        %v510 = vadd.f32 0.0, %v509
        %v511 = vpop.f32.mrf.mxu0
        %512 = vmatprep.mubr.bf16.mxu0 0
        %513 = vmatmul.mubr.bf16.gmra.mxu0 %v379
        %v514 = vpop.f32.mrf.mxu0
        %v515 = vadd.f32 0.0, %v514
        %v516 = vpop.f32.mrf.mxu0
        %v517 = vpop.f32.mrf.mxu0
        %v518 = vadd.f32 0.0, %v517
        %v519 = vpop.f32.mrf.mxu0
        %520 = vmatprep.mubr.bf16.mxu0 0
        %521 = vmatmul.mubr.bf16.gmra.mxu0 %v382
        %v522 = vpop.f32.mrf.mxu0
        %v523 = vadd.f32 0.0, %v522
        %v524 = vpop.f32.mrf.mxu0
        %v525 = vpop.f32.mrf.mxu0
        %v526 = vadd.f32 0.0, %v525
        %v527 = vpop.f32.mrf.mxu0
        %528 = vmatprep.mubr.bf16.mxu0 0
        %529 = vmatmul.mubr.bf16.gmra.mxu0 %v385
        %v530 = vpop.f32.mrf.mxu0
        %v531 = vadd.f32 0.0, %v530
        %v532 = vpop.f32.mrf.mxu0
        %v533 = vpop.f32.mrf.mxu0
        %v534 = vadd.f32 0.0, %v533
        %v535 = vpop.f32.mrf.mxu0
        %536 = vmatprep.mubr.bf16.mxu0 0
        %537 = vmatmul.mubr.bf16.gmra.mxu0 %v388
        %v538 = vpop.f32.mrf.mxu0
        %v539 = vadd.f32 0.0, %v538
        %v540 = vpop.f32.mrf.mxu0
        %v541 = vpop.f32.mrf.mxu0
        %v542 = vadd.f32 0.0, %v541
        %v543 = vpop.f32.mrf.mxu0
        %544 = vmatprep.mubr.bf16.mxu0 0
        %545 = vmatmul.mubr.bf16.gmra.mxu0 %v391
        %v546 = vpop.f32.mrf.mxu0
        %v547 = vadd.f32 0.0, %v546
        %v548 = vpop.f32.mrf.mxu0
        %v549 = vpop.f32.mrf.mxu0
        %v550 = vadd.f32 0.0, %v549
        %v551 = vpop.f32.mrf.mxu0
        %552 = vmatprep.mubr.bf16.mxu0 0
        %553 = vmatmul.mubr.bf16.gmra.mxu0 %v394
        %v554 = vpop.f32.mrf.mxu0
        %v555 = vadd.f32 0.0, %v554
        %v556 = vpop.f32.mrf.mxu0
        %v557 = vpop.f32.mrf.mxu0
        %v558 = vadd.f32 0.0, %v557
        %v559 = vpop.f32.mrf.mxu0
        %560 = vdwg.mxu0
        %v593 = vunpack.c.l.b16 %v189
        %v594 = vunpack.c.l.b16 %v190
        %v595 = vunpack.c.l.b16 %v191
        %v596 = vunpack.c.l.b16 %v192
        %v597 = vunpack.c.l.b16 %v193
        %v598 = vunpack.c.l.b16 %v194
        %v599 = vunpack.c.l.b16 %v195
        %v600 = vunpack.c.l.b16 %v196
        %v601 = vunpack.c.l.b16 %v197
        %v602 = vunpack.c.l.b16 %v198
        %v603 = vunpack.c.l.b16 %v199
        %v604 = vunpack.c.l.b16 %v200
        %v605 = vunpack.c.l.b16 %v201
        %v606 = vunpack.c.l.b16 %v202
        %v607 = vunpack.c.l.b16 %v203
        %v608 = vunpack.c.l.b16 %v204
        %v609 = vunpack.c.l.b16 %v205
        %v610 = vunpack.c.l.b16 %v206
        %v611 = vunpack.c.l.b16 %v207
        %v612 = vunpack.c.l.b16 %v208
        %v613 = vunpack.c.l.b16 %v209
        %v614 = vunpack.c.l.b16 %v210
        %v615 = vunpack.c.l.b16 %v211
        %v616 = vunpack.c.l.b16 %v212
        %v617 = vunpack.c.l.b16 %v213
        %v618 = vunpack.c.l.b16 %v214
        %v619 = vunpack.c.l.b16 %v215
        %v620 = vunpack.c.l.b16 %v216
        %v621 = vunpack.c.l.b16 %v217
        %v622 = vunpack.c.l.b16 %v218
        %v623 = vunpack.c.l.b16 %v219
        %v624 = vunpack.c.l.b16 %v220
        %v625 = vpack.c.b16 %v594, %v593
        %v626 = vpack.c.b16 %v596, %v595
        %v627 = vpack.c.b16 %v598, %v597
        %v628 = vpack.c.b16 %v600, %v599
        %v629 = vpack.c.b16 %v602, %v601
        %v630 = vpack.c.b16 %v604, %v603
        %v631 = vpack.c.b16 %v606, %v605
        %v632 = vpack.c.b16 %v608, %v607
        %v633 = vpack.c.b16 %v610, %v609
        %v634 = vpack.c.b16 %v612, %v611
        %v635 = vpack.c.b16 %v614, %v613
        %v636 = vpack.c.b16 %v616, %v615
        %v637 = vpack.c.b16 %v618, %v617
        %v638 = vpack.c.b16 %v620, %v619
        %v639 = vpack.c.b16 %v622, %v621
        %v640 = vpack.c.b16 %v624, %v623
        %v643 = vunpack.c.l.b16 %v221
        %v644 = vunpack.c.l.b16 %v222
        %v645 = vpack.c.b16 %v644, %v643
        %v647 = vsel %vm347, %v625, 0
        %v650 = vsel %vm347, %v626, 0
        %v653 = vsel %vm347, %v627, 0
        %v656 = vsel %vm347, %v628, 0
        %v659 = vsel %vm347, %v629, 0
        %v662 = vsel %vm347, %v630, 0
        %v665 = vsel %vm347, %v631, 0
        %v668 = vsel %vm347, %v632, 0
        %v671 = vsel %vm347, %v633, 0
        %v674 = vsel %vm347, %v634, 0
        %v677 = vsel %vm347, %v635, 0
        %v680 = vsel %vm347, %v636, 0
        %v683 = vsel %vm347, %v637, 0
        %v686 = vsel %vm347, %v638, 0
        %v689 = vsel %vm347, %v639, 0
        %v692 = vsel %vm347, %v640, 0
        %v695 = vsel %vm396, %v645, 0
        %697 = vmatprep.subr.bf16.mxu0 0
        %698 = vmatpush1.bf16.msra.mxu0 0
        %699 = vmatprep.subr.bf16.mxu0 0
        %700 = vmatpush1.bf16.msra.mxu0 0
        %701 = vmatprep.subr.bf16.mxu0 0
        %702 = vmatpush1.bf16.msra.mxu0 0
        %703 = vmatprep.subr.bf16.mxu0 0
        %704 = vmatpush1.bf16.msra.mxu0 0
        %705 = vmatprep.subr.bf16.mxu0 0
        %706 = vmatpush1.bf16.msra.mxu0 0
        %707 = vmatprep.subr.bf16.mxu0 0
        %708 = vmatpush1.bf16.msra.mxu0 0
        %709 = vmatprep.subr.bf16.mxu0 0
        %710 = vmatpush1.bf16.msra.mxu0 0
        %711 = vmatprep.subr.bf16.mxu0 0
        %712 = vmatpush1.bf16.msra.mxu0 %v695
        %713 = vmatprep.subr.bf16.mxu0 0
        %714 = vmatpush2.bf16.msra.mxu0 0
        %715 = vmatprep.subr.bf16.mxu0 0
        %716 = vmatpush2.bf16.msra.mxu0 0
        %717 = vmatprep.subr.bf16.mxu0 0
        %718 = vmatpush2.bf16.msra.mxu0 0
        %719 = vmatprep.subr.bf16.mxu0 0
        %720 = vmatpush2.bf16.msra.mxu0 0
        %721 = vmatprep.subr.bf16.mxu0 0
        %722 = vmatpush2.bf16.msra.mxu0 0
        %723 = vmatprep.subr.bf16.mxu0 0
        %724 = vmatpush2.bf16.msra.mxu0 0
        %725 = vmatprep.subr.bf16.mxu0 0
        %726 = vmatpush2.bf16.msra.mxu0 0
        %727 = vmatprep.subr.bf16.mxu0 0
        %728 = vmatpush2.bf16.msra.mxu0 0
        %729 = vmatprep.mubr.bf16.mxu0 0
        %730 = vmatmul.mubr.bf16.gmra.mxu0 %v647
        %v731 = vpop.f32.mrf.mxu0
        %v732 = vadd.f32 %v435, %v731
        %v733 = vpop.f32.mrf.mxu0
        %v734 = vpop.f32.mrf.mxu0
        %v735 = vadd.f32 %v438, %v734
        %v736 = vpop.f32.mrf.mxu0
        %737 = vmatprep.mubr.bf16.mxu0 0
        %738 = vmatmul.mubr.bf16.gmra.mxu0 %v650
        %v739 = vpop.f32.mrf.mxu0
        %v740 = vadd.f32 %v443, %v739
        %v741 = vpop.f32.mrf.mxu0
        %v742 = vpop.f32.mrf.mxu0
        %v743 = vadd.f32 %v446, %v742
        %v744 = vpop.f32.mrf.mxu0
        %745 = vmatprep.mubr.bf16.mxu0 0
        %746 = vmatmul.mubr.bf16.gmra.mxu0 %v653
        %v747 = vpop.f32.mrf.mxu0
        %v748 = vadd.f32 %v451, %v747
        %v749 = vpop.f32.mrf.mxu0
        %v750 = vpop.f32.mrf.mxu0
        %v751 = vadd.f32 %v454, %v750
        %v752 = vpop.f32.mrf.mxu0
        %753 = vmatprep.mubr.bf16.mxu0 0
        %754 = vmatmul.mubr.bf16.gmra.mxu0 %v656
        %v755 = vpop.f32.mrf.mxu0
        %v756 = vadd.f32 %v459, %v755
        %v757 = vpop.f32.mrf.mxu0
        %v758 = vpop.f32.mrf.mxu0
        %v759 = vadd.f32 %v462, %v758
        %v760 = vpop.f32.mrf.mxu0
        %761 = vmatprep.mubr.bf16.mxu0 0
        %762 = vmatmul.mubr.bf16.gmra.mxu0 %v659
        %v763 = vpop.f32.mrf.mxu0
        %v764 = vadd.f32 %v467, %v763
        %v765 = vpop.f32.mrf.mxu0
        %v766 = vpop.f32.mrf.mxu0
        %v767 = vadd.f32 %v470, %v766
        %v768 = vpop.f32.mrf.mxu0
        %769 = vmatprep.mubr.bf16.mxu0 0
        %770 = vmatmul.mubr.bf16.gmra.mxu0 %v662
        %v771 = vpop.f32.mrf.mxu0
        %v772 = vadd.f32 %v475, %v771
        %v773 = vpop.f32.mrf.mxu0
        %v774 = vpop.f32.mrf.mxu0
        %v775 = vadd.f32 %v478, %v774
        %v776 = vpop.f32.mrf.mxu0
        %777 = vmatprep.mubr.bf16.mxu0 0
        %778 = vmatmul.mubr.bf16.gmra.mxu0 %v665
        %v779 = vpop.f32.mrf.mxu0
        %v780 = vadd.f32 %v483, %v779
        %v781 = vpop.f32.mrf.mxu0
        %v782 = vpop.f32.mrf.mxu0
        %v783 = vadd.f32 %v486, %v782
        %v784 = vpop.f32.mrf.mxu0
        %785 = vmatprep.mubr.bf16.mxu0 0
        %786 = vmatmul.mubr.bf16.gmra.mxu0 %v668
        %v787 = vpop.f32.mrf.mxu0
        %v788 = vadd.f32 %v491, %v787
        %v789 = vpop.f32.mrf.mxu0
        %v790 = vpop.f32.mrf.mxu0
        %v791 = vadd.f32 %v494, %v790
        %v792 = vpop.f32.mrf.mxu0
        %793 = vmatprep.mubr.bf16.mxu0 0
        %794 = vmatmul.mubr.bf16.gmra.mxu0 %v671
        %v795 = vpop.f32.mrf.mxu0
        %v796 = vadd.f32 %v499, %v795
        %v797 = vpop.f32.mrf.mxu0
        %v798 = vpop.f32.mrf.mxu0
        %v799 = vadd.f32 %v502, %v798
        %v800 = vpop.f32.mrf.mxu0
        %801 = vmatprep.mubr.bf16.mxu0 0
        %802 = vmatmul.mubr.bf16.gmra.mxu0 %v674
        %v803 = vpop.f32.mrf.mxu0
        %v804 = vadd.f32 %v507, %v803
        %v805 = vpop.f32.mrf.mxu0
        %v806 = vpop.f32.mrf.mxu0
        %v807 = vadd.f32 %v510, %v806
        %v808 = vpop.f32.mrf.mxu0
        %809 = vmatprep.mubr.bf16.mxu0 0
        %810 = vmatmul.mubr.bf16.gmra.mxu0 %v677
        %v811 = vpop.f32.mrf.mxu0
        %v812 = vadd.f32 %v515, %v811
        %v813 = vpop.f32.mrf.mxu0
        %v814 = vpop.f32.mrf.mxu0
        %v815 = vadd.f32 %v518, %v814
        %v816 = vpop.f32.mrf.mxu0
        %817 = vmatprep.mubr.bf16.mxu0 0
        %818 = vmatmul.mubr.bf16.gmra.mxu0 %v680
        %v819 = vpop.f32.mrf.mxu0
        %v820 = vadd.f32 %v523, %v819
        %v821 = vpop.f32.mrf.mxu0
        %v822 = vpop.f32.mrf.mxu0
        %v823 = vadd.f32 %v526, %v822
        %v824 = vpop.f32.mrf.mxu0
        %825 = vmatprep.mubr.bf16.mxu0 0
        %826 = vmatmul.mubr.bf16.gmra.mxu0 %v683
        %v827 = vpop.f32.mrf.mxu0
        %v828 = vadd.f32 %v531, %v827
        %v829 = vpop.f32.mrf.mxu0
        %v830 = vpop.f32.mrf.mxu0
        %v831 = vadd.f32 %v534, %v830
        %v832 = vpop.f32.mrf.mxu0
        %833 = vmatprep.mubr.bf16.mxu0 0
        %834 = vmatmul.mubr.bf16.gmra.mxu0 %v686
        %v835 = vpop.f32.mrf.mxu0
        %v836 = vadd.f32 %v539, %v835
        %v837 = vpop.f32.mrf.mxu0
        %v838 = vpop.f32.mrf.mxu0
        %v839 = vadd.f32 %v542, %v838
        %v840 = vpop.f32.mrf.mxu0
        %841 = vmatprep.mubr.bf16.mxu0 0
        %842 = vmatmul.mubr.bf16.gmra.mxu0 %v689
        %v843 = vpop.f32.mrf.mxu0
        %v844 = vadd.f32 %v547, %v843
        %v845 = vpop.f32.mrf.mxu0
        %v846 = vpop.f32.mrf.mxu0
        %v847 = vadd.f32 %v550, %v846
        %v848 = vpop.f32.mrf.mxu0
        %849 = vmatprep.mubr.bf16.mxu0 0
        %850 = vmatmul.mubr.bf16.gmra.mxu0 %v692
        %v851 = vpop.f32.mrf.mxu0
        %v852 = vadd.f32 %v555, %v851
        %v853 = vpop.f32.mrf.mxu0
        %v854 = vpop.f32.mrf.mxu0
        %v855 = vadd.f32 %v558, %v854
        %v856 = vpop.f32.mrf.mxu0
        %857 = vdwg.mxu0
        %s858 = sadd.s32 %s185, 2
        %s859 = smul.u32 %s858, 2
        %s860 = smul.addr %s859, 4
        %s861 = scalar_lea.vmem %s182, %s860
        %v862 = vld [vmem:[%s861] sm:$0xf]
        %v863 = vld [vmem:[%s861 + $0x4] sm:$0xf]
        %v864 = vld [vmem:[%s861 + $0x8] sm:$0xf]
        %v865 = vld [vmem:[%s861 + $0xc] sm:$0xf]
        %v866 = vld [vmem:[%s861 + $0x10] sm:$0xf]
        %v867 = vld [vmem:[%s861 + $0x14] sm:$0xf]
        %v868 = vld [vmem:[%s861 + $0x18] sm:$0xf]
        %v869 = vld [vmem:[%s861 + $0x1c] sm:$0xf]
        %v870 = vld [vmem:[%s861 + $0x20] sm:$0xf]
        %v871 = vld [vmem:[%s861 + $0x24] sm:$0xf]
        %v872 = vld [vmem:[%s861 + $0x28] sm:$0xf]
        %v873 = vld [vmem:[%s861 + $0x2c] sm:$0xf]
        %v874 = vld [vmem:[%s861 + $0x30] sm:$0xf]
        %v875 = vld [vmem:[%s861 + $0x34] sm:$0xf]
        %v876 = vld [vmem:[%s861 + $0x38] sm:$0xf]
        %v877 = vld [vmem:[%s861 + $0x3c] sm:$0xf]
        %v878 = vld [vmem:[%s861 + $0x40] sm:$0xf]
        %v879 = vld [vmem:[%s861 + $0x44] sm:$0xf]
        %v880 = vld [vmem:[%s861 + $0x48] sm:$0xf]
        %v881 = vld [vmem:[%s861 + $0x4c] sm:$0xf]
        %v882 = vld [vmem:[%s861 + $0x50] sm:$0xf]
        %v883 = vld [vmem:[%s861 + $0x54] sm:$0xf]
        %v884 = vld [vmem:[%s861 + $0x58] sm:$0xf]
        %v885 = vld [vmem:[%s861 + $0x5c] sm:$0xf]
        %v886 = vld [vmem:[%s861 + $0x60] sm:$0xf]
        %v887 = vld [vmem:[%s861 + $0x64] sm:$0xf]
        %v888 = vld [vmem:[%s861 + $0x68] sm:$0xf]
        %v889 = vld [vmem:[%s861 + $0x6c] sm:$0xf]
        %v890 = vld [vmem:[%s861 + $0x70] sm:$0xf]
        %v891 = vld [vmem:[%s861 + $0x74] sm:$0xf]
        %v892 = vld [vmem:[%s861 + $0x78] sm:$0xf]
        %v893 = vld [vmem:[%s861 + $0x7c] sm:$0xf]
        %s894 = scalar_lea.vmem %s1, 16
        %v895 = vld [vmem:[%s894] sm:$0xf]
        %v896 = vld [vmem:[%s894 + $0x4] sm:$0x3]
        %v929 = vunpack.c.l.b16 %v862
        %v930 = vunpack.c.l.b16 %v863
        %v931 = vunpack.c.l.b16 %v864
        %v932 = vunpack.c.l.b16 %v865
        %v933 = vunpack.c.l.b16 %v866
        %v934 = vunpack.c.l.b16 %v867
        %v935 = vunpack.c.l.b16 %v868
        %v936 = vunpack.c.l.b16 %v869
        %v937 = vunpack.c.l.b16 %v870
        %v938 = vunpack.c.l.b16 %v871
        %v939 = vunpack.c.l.b16 %v872
        %v940 = vunpack.c.l.b16 %v873
        %v941 = vunpack.c.l.b16 %v874
        %v942 = vunpack.c.l.b16 %v875
        %v943 = vunpack.c.l.b16 %v876
        %v944 = vunpack.c.l.b16 %v877
        %v945 = vunpack.c.l.b16 %v878
        %v946 = vunpack.c.l.b16 %v879
        %v947 = vunpack.c.l.b16 %v880
        %v948 = vunpack.c.l.b16 %v881
        %v949 = vunpack.c.l.b16 %v882
        %v950 = vunpack.c.l.b16 %v883
        %v951 = vunpack.c.l.b16 %v884
        %v952 = vunpack.c.l.b16 %v885
        %v953 = vunpack.c.l.b16 %v886
        %v954 = vunpack.c.l.b16 %v887
        %v955 = vunpack.c.l.b16 %v888
        %v956 = vunpack.c.l.b16 %v889
        %v957 = vunpack.c.l.b16 %v890
        %v958 = vunpack.c.l.b16 %v891
        %v959 = vunpack.c.l.b16 %v892
        %v960 = vunpack.c.l.b16 %v893
        %v961 = vpack.c.b16 %v930, %v929
        %v962 = vpack.c.b16 %v932, %v931
        %v963 = vpack.c.b16 %v934, %v933
        %v964 = vpack.c.b16 %v936, %v935
        %v965 = vpack.c.b16 %v938, %v937
        %v966 = vpack.c.b16 %v940, %v939
        %v967 = vpack.c.b16 %v942, %v941
        %v968 = vpack.c.b16 %v944, %v943
        %v969 = vpack.c.b16 %v946, %v945
        %v970 = vpack.c.b16 %v948, %v947
        %v971 = vpack.c.b16 %v950, %v949
        %v972 = vpack.c.b16 %v952, %v951
        %v973 = vpack.c.b16 %v954, %v953
        %v974 = vpack.c.b16 %v956, %v955
        %v975 = vpack.c.b16 %v958, %v957
        %v976 = vpack.c.b16 %v960, %v959
        %v979 = vunpack.c.l.b16 %v895
        %v980 = vunpack.c.l.b16 %v896
        %v981 = vpack.c.b16 %v980, %v979
        %v983 = vsel %vm347, %v961, 0
        %v986 = vsel %vm347, %v962, 0
        %v989 = vsel %vm347, %v963, 0
        %v992 = vsel %vm347, %v964, 0
        %v995 = vsel %vm347, %v965, 0
        %v998 = vsel %vm347, %v966, 0
        %v1001 = vsel %vm347, %v967, 0
        %v1004 = vsel %vm347, %v968, 0
        %v1007 = vsel %vm347, %v969, 0
        %v1010 = vsel %vm347, %v970, 0
        %v1013 = vsel %vm347, %v971, 0
        %v1016 = vsel %vm347, %v972, 0
        %v1019 = vsel %vm347, %v973, 0
        %v1022 = vsel %vm347, %v974, 0
        %v1025 = vsel %vm347, %v975, 0
        %v1028 = vsel %vm347, %v976, 0
        %v1031 = vsel %vm396, %v981, 0
        %1033 = vmatprep.subr.bf16.mxu0 0
        %1034 = vmatpush1.bf16.msra.mxu0 0
        %1035 = vmatprep.subr.bf16.mxu0 0
        %1036 = vmatpush1.bf16.msra.mxu0 0
        %1037 = vmatprep.subr.bf16.mxu0 0
        %1038 = vmatpush1.bf16.msra.mxu0 0
        %1039 = vmatprep.subr.bf16.mxu0 0
        %1040 = vmatpush1.bf16.msra.mxu0 0
        %1041 = vmatprep.subr.bf16.mxu0 0
        %1042 = vmatpush1.bf16.msra.mxu0 0
        %1043 = vmatprep.subr.bf16.mxu0 0
        %1044 = vmatpush1.bf16.msra.mxu0 0
        %1045 = vmatprep.subr.bf16.mxu0 0
        %1046 = vmatpush1.bf16.msra.mxu0 0
        %1047 = vmatprep.subr.bf16.mxu0 0
        %1048 = vmatpush1.bf16.msra.mxu0 %v1031
        %1049 = vmatprep.subr.bf16.mxu0 0
        %1050 = vmatpush2.bf16.msra.mxu0 0
        %1051 = vmatprep.subr.bf16.mxu0 0
        %1052 = vmatpush2.bf16.msra.mxu0 0
        %1053 = vmatprep.subr.bf16.mxu0 0
        %1054 = vmatpush2.bf16.msra.mxu0 0
        %1055 = vmatprep.subr.bf16.mxu0 0
        %1056 = vmatpush2.bf16.msra.mxu0 0
        %1057 = vmatprep.subr.bf16.mxu0 0
        %1058 = vmatpush2.bf16.msra.mxu0 0
        %1059 = vmatprep.subr.bf16.mxu0 0
        %1060 = vmatpush2.bf16.msra.mxu0 0
        %1061 = vmatprep.subr.bf16.mxu0 0
        %1062 = vmatpush2.bf16.msra.mxu0 0
        %1063 = vmatprep.subr.bf16.mxu0 0
        %1064 = vmatpush2.bf16.msra.mxu0 0
        %1065 = vmatprep.mubr.bf16.mxu0 0
        %1066 = vmatmul.mubr.bf16.gmra.mxu0 %v983
        %v1067 = vpop.f32.mrf.mxu0
        %v1068 = vadd.f32 0.0, %v1067
        %v1069 = vpop.f32.mrf.mxu0
        %v1070 = vpop.f32.mrf.mxu0
        %v1071 = vadd.f32 0.0, %v1070
        %v1072 = vpop.f32.mrf.mxu0
        %1073 = vmatprep.mubr.bf16.mxu0 0
        %1074 = vmatmul.mubr.bf16.gmra.mxu0 %v986
        %v1075 = vpop.f32.mrf.mxu0
        %v1076 = vadd.f32 0.0, %v1075
        %v1077 = vpop.f32.mrf.mxu0
        %v1078 = vpop.f32.mrf.mxu0
        %v1079 = vadd.f32 0.0, %v1078
        %v1080 = vpop.f32.mrf.mxu0
        %1081 = vmatprep.mubr.bf16.mxu0 0
        %1082 = vmatmul.mubr.bf16.gmra.mxu0 %v989
        %v1083 = vpop.f32.mrf.mxu0
        %v1084 = vadd.f32 0.0, %v1083
        %v1085 = vpop.f32.mrf.mxu0
        %v1086 = vpop.f32.mrf.mxu0
        %v1087 = vadd.f32 0.0, %v1086
        %v1088 = vpop.f32.mrf.mxu0
        %1089 = vmatprep.mubr.bf16.mxu0 0
        %1090 = vmatmul.mubr.bf16.gmra.mxu0 %v992
        %v1091 = vpop.f32.mrf.mxu0
        %v1092 = vadd.f32 0.0, %v1091
        %v1093 = vpop.f32.mrf.mxu0
        %v1094 = vpop.f32.mrf.mxu0
        %v1095 = vadd.f32 0.0, %v1094
        %v1096 = vpop.f32.mrf.mxu0
        %1097 = vmatprep.mubr.bf16.mxu0 0
        %1098 = vmatmul.mubr.bf16.gmra.mxu0 %v995
        %v1099 = vpop.f32.mrf.mxu0
        %v1100 = vadd.f32 0.0, %v1099
        %v1101 = vpop.f32.mrf.mxu0
        %v1102 = vpop.f32.mrf.mxu0
        %v1103 = vadd.f32 0.0, %v1102
        %v1104 = vpop.f32.mrf.mxu0
        %1105 = vmatprep.mubr.bf16.mxu0 0
        %1106 = vmatmul.mubr.bf16.gmra.mxu0 %v998
        %v1107 = vpop.f32.mrf.mxu0
        %v1108 = vadd.f32 0.0, %v1107
        %v1109 = vpop.f32.mrf.mxu0
        %v1110 = vpop.f32.mrf.mxu0
        %v1111 = vadd.f32 0.0, %v1110
        %v1112 = vpop.f32.mrf.mxu0
        %1113 = vmatprep.mubr.bf16.mxu0 0
        %1114 = vmatmul.mubr.bf16.gmra.mxu0 %v1001
        %v1115 = vpop.f32.mrf.mxu0
        %v1116 = vadd.f32 0.0, %v1115
        %v1117 = vpop.f32.mrf.mxu0
        %v1118 = vpop.f32.mrf.mxu0
        %v1119 = vadd.f32 0.0, %v1118
        %v1120 = vpop.f32.mrf.mxu0
        %1121 = vmatprep.mubr.bf16.mxu0 0
        %1122 = vmatmul.mubr.bf16.gmra.mxu0 %v1004
        %v1123 = vpop.f32.mrf.mxu0
        %v1124 = vadd.f32 0.0, %v1123
        %v1125 = vpop.f32.mrf.mxu0
        %v1126 = vpop.f32.mrf.mxu0
        %v1127 = vadd.f32 0.0, %v1126
        %v1128 = vpop.f32.mrf.mxu0
        %1129 = vmatprep.mubr.bf16.mxu0 0
        %1130 = vmatmul.mubr.bf16.gmra.mxu0 %v1007
        %v1131 = vpop.f32.mrf.mxu0
        %v1132 = vadd.f32 0.0, %v1131
        %v1133 = vpop.f32.mrf.mxu0
        %v1134 = vpop.f32.mrf.mxu0
        %v1135 = vadd.f32 0.0, %v1134
        %v1136 = vpop.f32.mrf.mxu0
        %1137 = vmatprep.mubr.bf16.mxu0 0
        %1138 = vmatmul.mubr.bf16.gmra.mxu0 %v1010
        %v1139 = vpop.f32.mrf.mxu0
        %v1140 = vadd.f32 0.0, %v1139
        %v1141 = vpop.f32.mrf.mxu0
        %v1142 = vpop.f32.mrf.mxu0
        %v1143 = vadd.f32 0.0, %v1142
        %v1144 = vpop.f32.mrf.mxu0
        %1145 = vmatprep.mubr.bf16.mxu0 0
        %1146 = vmatmul.mubr.bf16.gmra.mxu0 %v1013
        %v1147 = vpop.f32.mrf.mxu0
        %v1148 = vadd.f32 0.0, %v1147
        %v1149 = vpop.f32.mrf.mxu0
        %v1150 = vpop.f32.mrf.mxu0
        %v1151 = vadd.f32 0.0, %v1150
        %v1152 = vpop.f32.mrf.mxu0
        %1153 = vmatprep.mubr.bf16.mxu0 0
        %1154 = vmatmul.mubr.bf16.gmra.mxu0 %v1016
        %v1155 = vpop.f32.mrf.mxu0
        %v1156 = vadd.f32 0.0, %v1155
        %v1157 = vpop.f32.mrf.mxu0
        %v1158 = vpop.f32.mrf.mxu0
        %v1159 = vadd.f32 0.0, %v1158
        %v1160 = vpop.f32.mrf.mxu0
        %1161 = vmatprep.mubr.bf16.mxu0 0
        %1162 = vmatmul.mubr.bf16.gmra.mxu0 %v1019
        %v1163 = vpop.f32.mrf.mxu0
        %v1164 = vadd.f32 0.0, %v1163
        %v1165 = vpop.f32.mrf.mxu0
        %v1166 = vpop.f32.mrf.mxu0
        %v1167 = vadd.f32 0.0, %v1166
        %v1168 = vpop.f32.mrf.mxu0
        %1169 = vmatprep.mubr.bf16.mxu0 0
        %1170 = vmatmul.mubr.bf16.gmra.mxu0 %v1022
        %v1171 = vpop.f32.mrf.mxu0
        %v1172 = vadd.f32 0.0, %v1171
        %v1173 = vpop.f32.mrf.mxu0
        %v1174 = vpop.f32.mrf.mxu0
        %v1175 = vadd.f32 0.0, %v1174
        %v1176 = vpop.f32.mrf.mxu0
        %1177 = vmatprep.mubr.bf16.mxu0 0
        %1178 = vmatmul.mubr.bf16.gmra.mxu0 %v1025
        %v1179 = vpop.f32.mrf.mxu0
        %v1180 = vadd.f32 0.0, %v1179
        %v1181 = vpop.f32.mrf.mxu0
        %v1182 = vpop.f32.mrf.mxu0
        %v1183 = vadd.f32 0.0, %v1182
        %v1184 = vpop.f32.mrf.mxu0
        %1185 = vmatprep.mubr.bf16.mxu0 0
        %1186 = vmatmul.mubr.bf16.gmra.mxu0 %v1028
        %v1187 = vpop.f32.mrf.mxu0
        %v1188 = vadd.f32 0.0, %v1187
        %v1189 = vpop.f32.mrf.mxu0
        %v1190 = vpop.f32.mrf.mxu0
        %v1191 = vadd.f32 0.0, %v1190
        %v1192 = vpop.f32.mrf.mxu0
        %1193 = vdwg.mxu0
        %v1194 = vadd.f32 %v732, %v1068
        %v1195 = vadd.f32 %v735, %v1071
        %v1196 = vadd.f32 %v740, %v1076
        %v1197 = vadd.f32 %v743, %v1079
        %v1198 = vadd.f32 %v748, %v1084
        %v1199 = vadd.f32 %v751, %v1087
        %v1200 = vadd.f32 %v756, %v1092
        %v1201 = vadd.f32 %v759, %v1095
        %v1202 = vadd.f32 %v764, %v1100
        %v1203 = vadd.f32 %v767, %v1103
        %v1204 = vadd.f32 %v772, %v1108
        %v1205 = vadd.f32 %v775, %v1111
        %v1206 = vadd.f32 %v780, %v1116
        %v1207 = vadd.f32 %v783, %v1119
        %v1208 = vadd.f32 %v788, %v1124
        %v1209 = vadd.f32 %v791, %v1127
        %v1210 = vadd.f32 %v796, %v1132
        %v1211 = vadd.f32 %v799, %v1135
        %v1212 = vadd.f32 %v804, %v1140
        %v1213 = vadd.f32 %v807, %v1143
        %v1214 = vadd.f32 %v812, %v1148
        %v1215 = vadd.f32 %v815, %v1151
        %v1216 = vadd.f32 %v820, %v1156
        %v1217 = vadd.f32 %v823, %v1159
        %v1218 = vadd.f32 %v828, %v1164
        %v1219 = vadd.f32 %v831, %v1167
        %v1220 = vadd.f32 %v836, %v1172
        %v1221 = vadd.f32 %v839, %v1175
        %v1222 = vadd.f32 %v844, %v1180
        %v1223 = vadd.f32 %v847, %v1183
        %v1224 = vadd.f32 %v852, %v1188
        %v1225 = vadd.f32 %v855, %v1191
        %v1226 = vld [vmem:[%s2] sm:$0x1]
        %v1228 = vlaneseq
        %v1229 = vshrl.u32 %v1228, 7
        %v1230 = vsub.s32 0, %v1229
        %v1231 = vrot.slane %v1226, %v1230
        %v1233 = vadd.f32 %v1194, %v1231
        %v1234 = vadd.f32 %v1195, %v1231
        %v1235 = vadd.f32 %v1196, %v1231
        %v1236 = vadd.f32 %v1197, %v1231
        %v1237 = vadd.f32 %v1198, %v1231
        %v1238 = vadd.f32 %v1199, %v1231
        %v1239 = vadd.f32 %v1200, %v1231
        %v1240 = vadd.f32 %v1201, %v1231
        %v1241 = vadd.f32 %v1202, %v1231
        %v1242 = vadd.f32 %v1203, %v1231
        %v1243 = vadd.f32 %v1204, %v1231
        %v1244 = vadd.f32 %v1205, %v1231
        %v1245 = vadd.f32 %v1206, %v1231
        %v1246 = vadd.f32 %v1207, %v1231
        %v1247 = vadd.f32 %v1208, %v1231
        %v1248 = vadd.f32 %v1209, %v1231
        %v1249 = vadd.f32 %v1210, %v1231
        %v1250 = vadd.f32 %v1211, %v1231
        %v1251 = vadd.f32 %v1212, %v1231
        %v1252 = vadd.f32 %v1213, %v1231
        %v1253 = vadd.f32 %v1214, %v1231
        %v1254 = vadd.f32 %v1215, %v1231
        %v1255 = vadd.f32 %v1216, %v1231
        %v1256 = vadd.f32 %v1217, %v1231
        %v1257 = vadd.f32 %v1218, %v1231
        %v1258 = vadd.f32 %v1219, %v1231
        %v1259 = vadd.f32 %v1220, %v1231
        %v1260 = vadd.f32 %v1221, %v1231
        %v1261 = vadd.f32 %v1222, %v1231
        %v1262 = vadd.f32 %v1223, %v1231
        %v1263 = vadd.f32 %v1224, %v1231
        %v1264 = vadd.f32 %v1225, %v1231
        %v1265 = vmax.f32 %v1233, 0.0
        %v1266 = vmax.f32 %v1234, 0.0
        %v1267 = vmax.f32 %v1235, 0.0
        %v1268 = vmax.f32 %v1236, 0.0
        %v1269 = vmax.f32 %v1237, 0.0
        %v1270 = vmax.f32 %v1238, 0.0
        %v1271 = vmax.f32 %v1239, 0.0
        %v1272 = vmax.f32 %v1240, 0.0
        %v1273 = vmax.f32 %v1241, 0.0
        %v1274 = vmax.f32 %v1242, 0.0
        %v1275 = vmax.f32 %v1243, 0.0
        %v1276 = vmax.f32 %v1244, 0.0
        %v1277 = vmax.f32 %v1245, 0.0
        %v1278 = vmax.f32 %v1246, 0.0
        %v1279 = vmax.f32 %v1247, 0.0
        %v1280 = vmax.f32 %v1248, 0.0
        %v1281 = vmax.f32 %v1249, 0.0
        %v1282 = vmax.f32 %v1250, 0.0
        %v1283 = vmax.f32 %v1251, 0.0
        %v1284 = vmax.f32 %v1252, 0.0
        %v1285 = vmax.f32 %v1253, 0.0
        %v1286 = vmax.f32 %v1254, 0.0
        %v1287 = vmax.f32 %v1255, 0.0
        %v1288 = vmax.f32 %v1256, 0.0
        %v1289 = vmax.f32 %v1257, 0.0
        %v1290 = vmax.f32 %v1258, 0.0
        %v1291 = vmax.f32 %v1259, 0.0
        %v1292 = vmax.f32 %v1260, 0.0
        %v1293 = vmax.f32 %v1261, 0.0
        %v1294 = vmax.f32 %v1262, 0.0
        %v1295 = vmax.f32 %v1263, 0.0
        %v1296 = vmax.f32 %v1264, 0.0
        %v1297 = vpack.c.bf16 %v1266, %v1265
        %v1298 = vpack.c.bf16 %v1268, %v1267
        %v1299 = vpack.c.bf16 %v1270, %v1269
        %v1300 = vpack.c.bf16 %v1272, %v1271
        %v1301 = vpack.c.bf16 %v1274, %v1273
        %v1302 = vpack.c.bf16 %v1276, %v1275
        %v1303 = vpack.c.bf16 %v1278, %v1277
        %v1304 = vpack.c.bf16 %v1280, %v1279
        %v1305 = vpack.c.bf16 %v1282, %v1281
        %v1306 = vpack.c.bf16 %v1284, %v1283
        %v1307 = vpack.c.bf16 %v1286, %v1285
        %v1308 = vpack.c.bf16 %v1288, %v1287
        %v1309 = vpack.c.bf16 %v1290, %v1289
        %v1310 = vpack.c.bf16 %v1292, %v1291
        %v1311 = vpack.c.bf16 %v1294, %v1293
        %v1312 = vpack.c.bf16 %v1296, %v1295
        %v1329 = vunpack.c.l.b16 %v1297
        %v1330 = vunpack.c.h.b16 %v1297
        %v1331 = vunpack.c.l.b16 %v1298
        %v1332 = vunpack.c.h.b16 %v1298
        %v1333 = vunpack.c.l.b16 %v1299
        %v1334 = vunpack.c.h.b16 %v1299
        %v1335 = vunpack.c.l.b16 %v1300
        %v1336 = vunpack.c.h.b16 %v1300
        %v1337 = vunpack.c.l.b16 %v1301
        %v1338 = vunpack.c.h.b16 %v1301
        %v1339 = vunpack.c.l.b16 %v1302
        %v1340 = vunpack.c.h.b16 %v1302
        %v1341 = vunpack.c.l.b16 %v1303
        %v1342 = vunpack.c.h.b16 %v1303
        %v1343 = vunpack.c.l.b16 %v1304
        %v1344 = vunpack.c.h.b16 %v1304
        %v1345 = vunpack.c.l.b16 %v1305
        %v1346 = vunpack.c.h.b16 %v1305
        %v1347 = vunpack.c.l.b16 %v1306
        %v1348 = vunpack.c.h.b16 %v1306
        %v1349 = vunpack.c.l.b16 %v1307
        %v1350 = vunpack.c.h.b16 %v1307
        %v1351 = vunpack.c.l.b16 %v1308
        %v1352 = vunpack.c.h.b16 %v1308
        %v1353 = vunpack.c.l.b16 %v1309
        %v1354 = vunpack.c.h.b16 %v1309
        %v1355 = vunpack.c.l.b16 %v1310
        %v1356 = vunpack.c.h.b16 %v1310
        %v1357 = vunpack.c.l.b16 %v1311
        %v1358 = vunpack.c.h.b16 %v1311
        %v1359 = vunpack.c.l.b16 %v1312
        %v1360 = vunpack.c.h.b16 %v1312
        %v1361 = vpack.c.b16 %v1329, %v1329
        %v1362 = vpack.c.b16 %v1330, %v1330
        %v1363 = vpack.c.b16 %v1331, %v1331
        %v1364 = vpack.c.b16 %v1332, %v1332
        %v1365 = vpack.c.b16 %v1333, %v1333
        %v1366 = vpack.c.b16 %v1334, %v1334
        %v1367 = vpack.c.b16 %v1335, %v1335
        %v1368 = vpack.c.b16 %v1336, %v1336
        %v1369 = vpack.c.b16 %v1337, %v1337
        %v1370 = vpack.c.b16 %v1338, %v1338
        %v1371 = vpack.c.b16 %v1339, %v1339
        %v1372 = vpack.c.b16 %v1340, %v1340
        %v1373 = vpack.c.b16 %v1341, %v1341
        %v1374 = vpack.c.b16 %v1342, %v1342
        %v1375 = vpack.c.b16 %v1343, %v1343
        %v1376 = vpack.c.b16 %v1344, %v1344
        %v1377 = vpack.c.b16 %v1345, %v1345
        %v1378 = vpack.c.b16 %v1346, %v1346
        %v1379 = vpack.c.b16 %v1347, %v1347
        %v1380 = vpack.c.b16 %v1348, %v1348
        %v1381 = vpack.c.b16 %v1349, %v1349
        %v1382 = vpack.c.b16 %v1350, %v1350
        %v1383 = vpack.c.b16 %v1351, %v1351
        %v1384 = vpack.c.b16 %v1352, %v1352
        %v1385 = vpack.c.b16 %v1353, %v1353
        %v1386 = vpack.c.b16 %v1354, %v1354
        %v1387 = vpack.c.b16 %v1355, %v1355
        %v1388 = vpack.c.b16 %v1356, %v1356
        %v1389 = vpack.c.b16 %v1357, %v1357
        %v1390 = vpack.c.b16 %v1358, %v1358
        %v1391 = vpack.c.b16 %v1359, %v1359
        %v1392 = vpack.c.b16 %v1360, %v1360
        %1425 = vst [vmem:[%s177] sm:$0xf] %v1361
        %1426 = vst [vmem:[%s177 + $0x4] sm:$0xf] %v1362
        %1427 = vst [vmem:[%s177 + $0x8] sm:$0xf] %v1363
        %1428 = vst [vmem:[%s177 + $0xc] sm:$0xf] %v1364
        %1429 = vst [vmem:[%s177 + $0x10] sm:$0xf] %v1365
        %1430 = vst [vmem:[%s177 + $0x14] sm:$0xf] %v1366
        %1431 = vst [vmem:[%s177 + $0x18] sm:$0xf] %v1367
        %1432 = vst [vmem:[%s177 + $0x1c] sm:$0xf] %v1368
        %1433 = vst [vmem:[%s177 + $0x20] sm:$0xf] %v1369
        %1434 = vst [vmem:[%s177 + $0x24] sm:$0xf] %v1370
        %1435 = vst [vmem:[%s177 + $0x28] sm:$0xf] %v1371
        %1436 = vst [vmem:[%s177 + $0x2c] sm:$0xf] %v1372
        %1437 = vst [vmem:[%s177 + $0x30] sm:$0xf] %v1373
        %1438 = vst [vmem:[%s177 + $0x34] sm:$0xf] %v1374
        %1439 = vst [vmem:[%s177 + $0x38] sm:$0xf] %v1375
        %1440 = vst [vmem:[%s177 + $0x3c] sm:$0xf] %v1376
        %1441 = vst [vmem:[%s177 + $0x40] sm:$0xf] %v1377
        %1442 = vst [vmem:[%s177 + $0x44] sm:$0xf] %v1378
        %1443 = vst [vmem:[%s177 + $0x48] sm:$0xf] %v1379
        %1444 = vst [vmem:[%s177 + $0x4c] sm:$0xf] %v1380
        %1445 = vst [vmem:[%s177 + $0x50] sm:$0xf] %v1381
        %1446 = vst [vmem:[%s177 + $0x54] sm:$0xf] %v1382
        %1447 = vst [vmem:[%s177 + $0x58] sm:$0xf] %v1383
        %1448 = vst [vmem:[%s177 + $0x5c] sm:$0xf] %v1384
        %1449 = vst [vmem:[%s177 + $0x60] sm:$0xf] %v1385
        %1450 = vst [vmem:[%s177 + $0x64] sm:$0xf] %v1386
        %1451 = vst [vmem:[%s177 + $0x68] sm:$0xf] %v1387
        %1452 = vst [vmem:[%s177 + $0x6c] sm:$0xf] %v1388
        %1453 = vst [vmem:[%s177 + $0x70] sm:$0xf] %v1389
        %1454 = vst [vmem:[%s177 + $0x74] sm:$0xf] %v1390
        %1455 = vst [vmem:[%s177 + $0x78] sm:$0xf] %v1391
        %1456 = vst [vmem:[%s177 + $0x7c] sm:$0xf] %v1392
        %s1457 = sand.u32 %s107, 1
        %s1458 = scalar_lea.sflag [#allocation3], %s1457
        %s1459 = sand.u32 %s107, 1
        %s1460 = smul.addr %s1459, 128
        %s1461 = scalar_lea.vmem [#allocation2], %s1460
        // Predicated region
        $region33: #{tpu_custom_call.1} parent=31 // pred_check
          %p1462 = pneg %p117
        $region34: #{tpu_custom_call.1} parent=31 // pred_check_branch
          %1464 = sbr.rel (%p1462) target = $region36
        $region35: #{tpu_custom_call.1} parent=31 // pred_region
          %s1465 = smul.u32 32, %s22
          %s1467 = ssub.s32 2048, 2048
          %1468 = vsyncadd %s1458, %s1467
          %s1469 = smul.addr %s21, 32
          %s1470 = sadd.s32 %s1465, %s1469
          %s1471 = smul.addr %s1470, 64
          %s1472 = scalar_lea.hbm %s3, %s1471
          %s1473 = sshll.u32 %s1461, 4
          %s1474 = int_to_ptr.vmem [resolvable:$true] %s1473
          %1479 = dma.vmem_to_hbm [thread:$0]  %s1474, 2048, %s1472, %s1458, 64, 64, 4
        $region36: #{tpu_custom_call.1} parent=31 // pred_fallthru
          _
      $region32: #{tpu_custom_call.1} parent=5 // pred_fallthru
        _
      %p1480 = scmp.le.s32.totalorder 2, %s12
      // Predicated region
      $region37: #{tpu_custom_call.1} parent=5 // pred_check
        %p1481 = pneg %p1480
      $region38: #{tpu_custom_call.1} parent=5 // pred_check_branch
        %1483 = sbr.rel (%p1481) target = $region40
      $region39: #{tpu_custom_call.1} parent=5 // pred_region
        %s1484 = ssub.s32 %s12, 2
        // Predicated region
        $region41: #{tpu_custom_call.1} parent=39 // pred_check
          %p1485 = pneg %p123
        $region42: #{tpu_custom_call.1} parent=39 // pred_check_branch
          %1487 = sbr.rel (%p1485) target = $region44
        $region43: #{tpu_custom_call.1} parent=39 // pred_region
          %s1488 = sand.u32 %s108, 1
          %s1489 = scalar_lea.sflag [#allocation3], %s1488
          %s1490 = sand.u32 %s108, 1
          %s1491 = smul.addr %s1490, 128
          %s1492 = scalar_lea.vmem [#allocation2], %s1491
          %1493 = dma.done %s1489, 2048
        $region44: #{tpu_custom_call.1} parent=39 // pred_fallthru
          _
      $region40: #{tpu_custom_call.1} parent=5 // pred_fallthru
        _
    $region6: #{tpu_custom_call.1} parent=1 // loop_footer
      %s16 = sadd.s32 1, %s12
    $region7: #{tpu_custom_call.1} parent=1 // loop_footer_branch
      %11 = sbr.rel target = $region3
    $region8: #{tpu_custom_call.1} parent=1 // loop_exit
      _
    %1494 = vsyncpa [#allocation3], 1
    %s1495 = scalar_lea.sflag [#allocation3], 1
    %1496 = vsyncpa %s1495, 1

</llo_original>
